<compile_context>
chip_gen: v7x
topology: tpu7x:2x2x1
jax: 0.10.0
libtpu: 0.0.40
codegen_flags: <defaults>
</compile_context>

<pallas_src>
import functools

import jax
import jax.numpy as jnp
from jax.experimental import pallas as pl
from jax.experimental.pallas import tpu as pltpu

_LANE = 128
_MIB = 1024 * 1024


def _round_up(x, m):
    return (x + m - 1) // m * m


def _device_kind():
    try:
        return jax.devices()[0].device_kind.lower()
    except Exception:
        return ""


def _is_v7x():
    kind = _device_kind()
    if "v7" in kind or "7x" in kind:
        return True
    try:
        name = str(getattr(pltpu.get_tpu_info(), "chip_version", "")).lower()
        return "7" in name
    except Exception:
        return False


def _is_v5e():
    kind = _device_kind()
    return ("v5e" in kind) or ("v5 lite" in kind) or ("v5lite" in kind)


def _vmem_budget_and_limit():
    """Returns (x double-buffer budget, scoped vmem limit), both in bytes."""
    vmem_bytes = 64 * _MIB  # conservative default: v7x per-TensorCore physical
    try:
        info = pltpu.get_tpu_info()
        vmem_bytes = int(getattr(info, "vmem_capacity_bytes", vmem_bytes))
    except Exception:
        pass
    if _is_v7x():
        # get_tpu_info may report per-chip capacity; clamp to per-TC physical.
        vmem_bytes = min(vmem_bytes, 64 * _MIB)
    # Mem-bound kernel: 512-1024 row tiles already sit at ~85% of roofline,
    # so a small x budget loses nothing while removing v7x spill/OOM risk.
    x_budget = min(24 * _MIB, vmem_bytes // 4)
    vmem_limit = max(x_budget + 8 * _MIB,
                     min(int(vmem_bytes * 0.70), vmem_bytes - 16 * _MIB))
    return x_budget, int(vmem_limit)


def _value_head_kernel_vpu(x_ref, w_ref, b_ref, o_ref, *, compute_dtype):
    # x_ref: (tm, H) tile of flattened hidden states (native dtype)
    # w_ref: (1, H)  Linear weight, resident across the grid
    # b_ref: (1, 1)  bias scalar in SMEM (f32)
    # o_ref: (1, tm) lane-dense output tile
    w = w_ref[...].astype(compute_dtype)
    x = x_ref[...].astype(compute_dtype)          # matches output.to(weight.dtype)
    # VPU multiply; the f32 widen is fused into the H-reduction so no
    # full-width (tm, H) f32 temporary is materialized.  Deliberately not the
    # MXU on v5e/v6e (the kernel is DMA-bound there).
    acc = jnp.sum(x * w, axis=-1, keepdims=True, dtype=jnp.float32)   # (tm, 1)
    acc = acc + b_ref[0, 0]
    # One sublane->lane relayout per tile, then an unmasked wide store
    # (tm is a multiple of 128).
    o_ref[...] = acc.reshape(1, -1).astype(o_ref.dtype)


def _value_head_kernel_mxu(x_ref, w_ref, b_ref, o_ref):
    # v7x path: route the multiply + K-reduction through the otherwise idle
    # MXU so the VALU slot is not the bottleneck at the higher HBM feed rate.
    # w_ref: (H, 128) -- weight in column 0, explicit zeros elsewhere, so the
    # matmul is fully tile-aligned regardless of H; only column 0 is consumed.
    w = w_ref[...]
    x = x_ref[...].astype(w.dtype)                # matches output.to(weight.dtype)
    acc = jnp.dot(x, w, preferred_element_type=jnp.float32)   # (tm, 128)
    acc = acc[:, 0:1] + b_ref[0, 0]                            # (tm, 1)
    o_ref[...] = acc.reshape(1, -1).astype(o_ref.dtype)


def value_head(hidden_states, weight, bias, *, tm=1024, use_mxu=None):
    """ValueHead forward. hidden_states: (B,S,H); weight: (1,H); bias: (1,).

    Returns (B, S, 1) in weight.dtype.
    """
    B, S, H = hidden_states.shape
    M = B * S
    # Keep the native HBM dtype (do NOT pre-cast to f32 -- HBM traffic is the
    # bottleneck); the cast to weight.dtype happens inside the kernel.
    x = hidden_states.reshape(M, H)

    if use_mxu is None:
        use_mxu = _is_v7x()

    itemsize = jnp.dtype(x.dtype).itemsize
    out_dtype = weight.dtype
    x_budget, vmem_limit = _vmem_budget_and_limit()

    # Largest 128-aligned row tile whose double-buffered x tiles fit the
    # budget (128-alignment => genuinely unmasked lane-dense output stores,
    # and guards caller-provided tm against (8,128) lowering violations).
    tm_cap = max(_LANE, (x_budget // (2 * H * itemsize)) // _LANE * _LANE)
    # Keep >= ~8 grid steps when M allows, so ("parallel",) can shard work
    # across v7x's two TensorCores and each TC's pipeline reaches steady state.
    tm_split = max(_LANE, _round_up(pl.cdiv(M, 8), _LANE))
    tm = max(_LANE, min(_round_up(tm, _LANE), tm_cap, tm_split,
                        _round_up(M, _LANE)))
    num_tiles = pl.cdiv(M, tm)

    bias2d = jnp.asarray(bias, jnp.float32).reshape(1, 1)

    if use_mxu:
        kernel = _value_head_kernel_mxu
        # Weight in column 0 of an (H, 128) slab -> tile-aligned matmul.
        w_arg = jnp.pad(weight.reshape(H, 1), ((0, 0), (0, _LANE - 1)))
        w_spec = pl.BlockSpec((H, _LANE), lambda i: (0, 0))
    else:
        # v5e has no native bf16 VPU: do the multiply in f32 there (the O(H)
        # per-tile weight upcast is negligible; kernel stays HBM-bound).
        compute_dtype = (jnp.float32
                         if (_is_v5e() and jnp.dtype(weight.dtype).itemsize < 4)
                         else weight.dtype)
        kernel = functools.partial(_value_head_kernel_vpu,
                                   compute_dtype=compute_dtype)
        w_arg = weight.reshape(1, H)
        w_spec = pl.BlockSpec((1, H), lambda i: (0, 0))

    cost = pl.CostEstimate(
        flops=2 * M * H,
        transcendentals=0,
        bytes_accessed=(M * H * itemsize
                        + M * jnp.dtype(out_dtype).itemsize
                        + H * jnp.dtype(weight.dtype).itemsize),
    )

    out = pl.pallas_call(
        kernel,
        # Lane-dense output slab (num_tiles, tm); sliced back to M rows below.
        out_shape=jax.ShapeDtypeStruct((num_tiles, tm), out_dtype),
        grid_spec=pltpu.PrefetchScalarGridSpec(
            num_scalar_prefetch=0,
            grid=(num_tiles,),
            in_specs=[
                pl.BlockSpec((tm, H), lambda i: (i, 0)),      # x tile
                w_spec,                                       # weight (resident)
                pl.BlockSpec((1, 1), lambda i: (0, 0),
                             memory_space=pltpu.SMEM),        # bias scalar
            ],
            out_specs=pl.BlockSpec((1, tm), lambda i: (i, 0)),
        ),
        compiler_params=pltpu.CompilerParams(
            dimension_semantics=("parallel",),   # shards grid across v7x's 2 TCs
            vmem_limit_bytes=vmem_limit,
        ),
        cost_estimate=cost,
    )(x, w_arg, bias2d)

    # NOTE: rows >= M of the last (partial) tile were computed on padded /
    # garbage input rows; each output row depends only on its own input row,
    # and those rows are sliced off right here.  Do not consume them elsewhere.
    return out.reshape(num_tiles * tm)[:M].reshape(B, S, 1)


def value_head_ref(hidden_states, weight, bias):
    # Pure-JAX reference (dropout is identity in eval mode).
    x = hidden_states.astype(weight.dtype)
    return jnp.einsum("bsh,oh->bso", x, weight) + bias


if __name__ == "__main__":
    # --- test 1: module-sized small shape, default (auto-detected) path ---
    B, S, H = 2, 8, 32
    k_x, k_w, k_b = jax.random.split(jax.random.PRNGKey(0), 3)
    hidden_states = jax.random.normal(k_x, (B, S, H), dtype=jnp.float32)
    bound = 1.0 / (H ** 0.5)
    weight = jax.random.uniform(k_w, (1, H), jnp.float32, -bound, bound)
    bias = jax.random.uniform(k_b, (1,), jnp.float32, -bound, bound)

    out = jax.block_until_ready(value_head(hidden_states, weight, bias))
    ref = value_head_ref(hidden_states, weight, bias)
    assert out.shape == (B, S, 1), out.shape
    assert jnp.allclose(out, ref, atol=1e-5, rtol=1e-5), "mismatch (test 1)"

    # --- test 2: multi-tile grid with a partial last tile, both compute paths ---
    B2, S2, H2 = 3, 100, 128          # M = 300 -> 3 tiles of tm=128, last partial
    k_x2, k_w2, k_b2 = jax.random.split(jax.random.PRNGKey(0), 3)
    hs2 = jax.random.normal(k_x2, (B2, S2, H2), dtype=jnp.float32)
    bound2 = 1.0 / (H2 ** 0.5)
    w2 = jax.random.uniform(k_w2, (1, H2), jnp.float32, -bound2, bound2)
    b2 = jax.random.uniform(k_b2, (1,), jnp.float32, -bound2, bound2)
    ref2 = value_head_ref(hs2, w2, b2)

    out_vpu = jax.block_until_ready(value_head(hs2, w2, b2, tm=128, use_mxu=False))
    assert out_vpu.shape == (B2, S2, 1), out_vpu.shape
    assert jnp.allclose(out_vpu, ref2, atol=1e-5, rtol=1e-5), "mismatch (test 2, VPU)"

    out_mxu = jax.block_until_ready(value_head(hs2, w2, b2, tm=128, use_mxu=True))
    assert jnp.allclose(out_mxu, ref2, atol=1e-5, rtol=1e-5), "mismatch (test 2, MXU)"

    # --- test 3: bf16 activations + bf16 weights (native-dtype HBM reads) ---
    B3, S3, H3 = 2, 64, 256
    k_x3, k_w3, k_b3 = jax.random.split(jax.random.PRNGKey(0), 3)
    hs3 = jax.random.normal(k_x3, (B3, S3, H3), dtype=jnp.bfloat16)
    bound3 = 1.0 / (H3 ** 0.5)
    w3 = jax.random.uniform(k_w3, (1, H3), jnp.float32, -bound3, bound3).astype(jnp.bfloat16)
    b3 = jax.random.uniform(k_b3, (1,), jnp.float32, -bound3, bound3).astype(jnp.bfloat16)

    out3 = jax.block_until_ready(value_head(hs3, w3, b3))
    ref3 = value_head_ref(hs3.astype(jnp.float32), w3.astype(jnp.float32),
                          b3.astype(jnp.float32))
    assert out3.shape == (B3, S3, 1), out3.shape
    assert out3.dtype == jnp.bfloat16, out3.dtype
    assert jnp.allclose(out3.astype(jnp.float32), ref3, atol=5e-2, rtol=5e-2), \
        "mismatch (test 3, bf16)"

    print("KERNEL_OK")
</pallas_src>

<mosaic_0001>
module attributes {stable_mosaic.version = 11 : i64} {
  func.func @_value_head_kernel_vpu(%arg0: i32, %arg1: memref<128x32xf32, #tpu.memory_space<vmem>>, %arg2: memref<1x32xf32, #tpu.memory_space<vmem>>, %arg3: memref<1x1xf32, #tpu.memory_space<smem>>, %arg4: memref<1x128xf32, #tpu.memory_space<vmem>>) attributes {dimension_semantics = [#tpu.dimension_semantics<parallel>], iteration_bounds = array<i64: 1>, scalar_prefetch = 0 : i64, scratch_operands = 0 : i64, tpu.core_type = #tpu.core_type<tc>, window_params = [{transform_indices = @transform_0, window_bounds = array<i64: 128, 32>}, {pipeline_mode = #tpu.pipeline_mode<synchronous>, transform_indices = @transform_1, window_bounds = array<i64: 1, 32>}, {transform_indices = @transform_2, window_bounds = array<i64: 1, 1>}, {transform_indices = @transform_3, window_bounds = array<i64: 1, 128>}]} {
    %c0 = arith.constant 0 : index
    %c0_0 = arith.constant 0 : index
    %0 = vector.load %arg2[%c0, %c0_0] : memref<1x32xf32, #tpu.memory_space<vmem>>, vector<1x32xf32>
    %c0_1 = arith.constant 0 : index
    %c0_2 = arith.constant 0 : index
    %1 = vector.load %arg1[%c0_1, %c0_2] : memref<128x32xf32, #tpu.memory_space<vmem>>, vector<128x32xf32>
    %2 = vector.broadcast %0 : vector<1x32xf32> to vector<128x32xf32>
    %3 = arith.mulf %1, %2 : vector<128x32xf32>
    %cst = arith.constant dense<0.000000e+00> : vector<128xf32>
    %4 = vector.multi_reduction <add>, %3, %cst [1] : vector<128x32xf32> to vector<128xf32>
    %5 = vector.shape_cast %4 : vector<128xf32> to vector<128x1xf32>
    %c0_3 = arith.constant 0 : index
    %c0_4 = arith.constant 0 : index
    %6 = memref.load %arg3[%c0_3, %c0_4] : memref<1x1xf32, #tpu.memory_space<smem>>
    %7 = vector.broadcast %6 : f32 to vector<128x1xf32>
    %8 = arith.addf %5, %7 : vector<128x1xf32>
    %9 = vector.shape_cast %8 : vector<128x1xf32> to vector<1x128xf32>
    %c0_5 = arith.constant 0 : index
    %c0_6 = arith.constant 0 : index
    %10 = vector.load %arg4[%c0_5, %c0_6] : memref<1x128xf32, #tpu.memory_space<vmem>>, vector<1x128xf32>
    tpu.vector_store %arg4[%c0_5, %c0_6], %9 {strides = array<i32>} : memref<1x128xf32, #tpu.memory_space<vmem>>, vector<1x128xf32>,
    return
  }
  func.func @transform_0(%arg0: i32) -> (i32, i32) {
    %c0_i32 = arith.constant 0 : i32
    %c0_i32_0 = arith.constant 0 : i32
    return %arg0, %c0_i32 : i32, i32
  }
  func.func @transform_1(%arg0: i32) -> (i32, i32) {
    %c0_i32 = arith.constant 0 : i32
    %c0_i32_0 = arith.constant 0 : i32
    %c0_i32_1 = arith.constant 0 : i32
    return %c0_i32, %c0_i32_0 : i32, i32
  }
  func.func @transform_2(%arg0: i32) -> (i32, i32) {
    %c0_i32 = arith.constant 0 : i32
    %c0_i32_0 = arith.constant 0 : i32
    %c0_i32_1 = arith.constant 0 : i32
    return %c0_i32, %c0_i32_0 : i32, i32
  }
  func.func @transform_3(%arg0: i32) -> (i32, i32) {
    %c0_i32 = arith.constant 0 : i32
    %c0_i32_0 = arith.constant 0 : i32
    return %arg0, %c0_i32 : i32, i32
  }
}

</mosaic_0001>

<llo_original>
// kernel: tpu_custom_call.1
$region0: #{tpu_custom_call.1}
  #allocation0 [shape = 'u32[]', space=smem, size = 0x4, offset = 0x4, fixed_abs, tag = 'smem constant byte address 0x4 - core index']
  #allocation1 [shape = 'u32[144,128]{1,0:T(1,128)}', space=vmem, size = 0x12000, scoped, tag = 'internal scratch']
  #allocation2 [shape = 'f32[1,1]{1,0:T(1,128)S(6)}', space=smem, size = 0x200, scoped, tag = 'scoped memory for tpu_custom_call.1']
  %s0 = inlined_call_operand.hbm [shape: f32[16,32], index: 0, kind: input, shape index: {}]
  %s1 = inlined_call_operand.vmem [shape: f32[1,32], index: 1, kind: input, shape index: {}]
  %s2 = inlined_call_operand.<no memory space> [shape: f32[1,1], index: 2, kind: input, shape index: {}]
  %s3 = inlined_call_operand.hbm [shape: f32[1,128], index: 3, kind: output, shape index: {}]
  %s4 = sld [smem:[#allocation0]]
  $region26: #{tpu_custom_call.1} parent=0
    _
  %s6 = ssub.s32 1, %s4
  %s7 = scalar_select 0, %s6, %s4
  %8 = sst [smem:[#allocation2]] %s2
  $region1: #{tpu_custom_call.1} parent=0
    #allocation3 [shape = 'u8[65536]{0}', space=vmem, size = 0x10000, scoped, tag = 'input window, operand 0, single buffered']
    #allocation4 [shape = 's32[1]{0}', space=sflag, size = 0x4, scoped, tag = 'scoped memory for tpu_custom_call.1']
    #allocation5 [shape = 's32[1]{0}', space=sflag, size = 0x4, scoped, tag = 'scoped memory for tpu_custom_call.1']
    #allocation6 [shape = 'u8[512]{0}', space=vmem, size = 0x400, scoped, tag = 'output window, operand 0, single buffered']
    %9 = vsyncpa [#allocation4], 0
    %10 = vsyncpa [#allocation5], 0
    // Predicated region
    $region2: #{tpu_custom_call.1} parent=1 // pred_check
      _
    $region3: #{tpu_custom_call.1} parent=1 // pred_check_branch
      %12 = sbr.rel (0) target = $region5
    $region4: #{tpu_custom_call.1} parent=1 // pred_region
      %s14 = ssub.s32 2048, 256
      %15 = vsyncadd [#allocation4], %s14
      %s16 = sshll.u32 [#allocation3], 4
      %s17 = int_to_ptr.vmem [resolvable:$true] %s16
      %22 = dma.hbm_to_vmem [thread:$0]  %s0, 256, %s17, [#allocation4], 128, 128, 8
    $region5: #{tpu_custom_call.1} parent=1 // pred_fallthru
      _
    // Predicated region
    $region6: #{tpu_custom_call.1} parent=1 // pred_check
      _
    $region7: #{tpu_custom_call.1} parent=1 // pred_check_branch
      %24 = sbr.rel (0) target = $region9
    $region8: #{tpu_custom_call.1} parent=1 // pred_region
      _
    $region9: #{tpu_custom_call.1} parent=1 // pred_fallthru
      _
    // Predicated region
    $region10: #{tpu_custom_call.1} parent=1 // pred_check
      _
    $region11: #{tpu_custom_call.1} parent=1 // pred_check_branch
      %26 = sbr.rel (0) target = $region13
    $region12: #{tpu_custom_call.1} parent=1 // pred_region
      _
    $region13: #{tpu_custom_call.1} parent=1 // pred_fallthru
      _
    // Predicated region
    $region14: #{tpu_custom_call.1} parent=1 // pred_check
      _
    $region15: #{tpu_custom_call.1} parent=1 // pred_check_branch
      %28 = sbr.rel (0) target = $region17
    $region16: #{tpu_custom_call.1} parent=1 // pred_region
      %29 = dma.done [#allocation4], 2048
    $region17: #{tpu_custom_call.1} parent=1 // pred_fallthru
      _
    %v30 = vld [vmem:[%s1] sm:$0x1]
    %v31 = vld [vmem:[#allocation3] sm:$0xff]
    %v32 = vld [vmem:[#allocation3 + $0x8] sm:$0xff]
    %v33 = vld [vmem:[#allocation3 + $0x10] sm:$0xff]
    %v34 = vld [vmem:[#allocation3 + $0x18] sm:$0xff]
    %v35 = vld [vmem:[#allocation3 + $0x20] sm:$0xff]
    %v36 = vld [vmem:[#allocation3 + $0x28] sm:$0xff]
    %v37 = vld [vmem:[#allocation3 + $0x30] sm:$0xff]
    %v38 = vld [vmem:[#allocation3 + $0x38] sm:$0xff]
    %v39 = vld [vmem:[#allocation3 + $0x40] sm:$0xff]
    %v40 = vld [vmem:[#allocation3 + $0x48] sm:$0xff]
    %v41 = vld [vmem:[#allocation3 + $0x50] sm:$0xff]
    %v42 = vld [vmem:[#allocation3 + $0x58] sm:$0xff]
    %v43 = vld [vmem:[#allocation3 + $0x60] sm:$0xff]
    %v44 = vld [vmem:[#allocation3 + $0x68] sm:$0xff]
    %v45 = vld [vmem:[#allocation3 + $0x70] sm:$0xff]
    %v46 = vld [vmem:[#allocation3 + $0x78] sm:$0xff]
    %v48 = vlaneseq
    %v49 = vshrl.u32 %v48, 7
    %v50 = vsub.s32 0, %v49
    %v51 = vrot.slane %v30, %v50
    %v53 = vmul.f32 %v31, %v51
    %v54 = vmul.f32 %v32, %v51
    %v55 = vmul.f32 %v33, %v51
    %v56 = vmul.f32 %v34, %v51
    %v57 = vmul.f32 %v35, %v51
    %v58 = vmul.f32 %v36, %v51
    %v59 = vmul.f32 %v37, %v51
    %v60 = vmul.f32 %v38, %v51
    %v61 = vmul.f32 %v39, %v51
    %v62 = vmul.f32 %v40, %v51
    %v63 = vmul.f32 %v41, %v51
    %v64 = vmul.f32 %v42, %v51
    %v65 = vmul.f32 %v43, %v51
    %v66 = vmul.f32 %v44, %v51
    %v67 = vmul.f32 %v45, %v51
    %v68 = vmul.f32 %v46, %v51
    %vm69 = vcmask 261120
    %v70 = vsel %vm69, %v53, 0.0
    %71 = vadd.xlane.f32.xlu0 %v70
    %v72 = vpop.xlane.xlu0 %71
    %v73 = vsel %vm69, %v54, 0.0
    %74 = vadd.xlane.f32.xlu0 %v73
    %v75 = vpop.xlane.xlu0 %74
    %v76 = vsel %vm69, %v55, 0.0
    %77 = vadd.xlane.f32.xlu0 %v76
    %v78 = vpop.xlane.xlu0 %77
    %v79 = vsel %vm69, %v56, 0.0
    %80 = vadd.xlane.f32.xlu0 %v79
    %v81 = vpop.xlane.xlu0 %80
    %v82 = vsel %vm69, %v57, 0.0
    %83 = vadd.xlane.f32.xlu0 %v82
    %v84 = vpop.xlane.xlu0 %83
    %v85 = vsel %vm69, %v58, 0.0
    %86 = vadd.xlane.f32.xlu0 %v85
    %v87 = vpop.xlane.xlu0 %86
    %v88 = vsel %vm69, %v59, 0.0
    %89 = vadd.xlane.f32.xlu0 %v88
    %v90 = vpop.xlane.xlu0 %89
    %v91 = vsel %vm69, %v60, 0.0
    %92 = vadd.xlane.f32.xlu0 %v91
    %v93 = vpop.xlane.xlu0 %92
    %v94 = vsel %vm69, %v61, 0.0
    %95 = vadd.xlane.f32.xlu0 %v94
    %v96 = vpop.xlane.xlu0 %95
    %v97 = vsel %vm69, %v62, 0.0
    %98 = vadd.xlane.f32.xlu0 %v97
    %v99 = vpop.xlane.xlu0 %98
    %v100 = vsel %vm69, %v63, 0.0
    %101 = vadd.xlane.f32.xlu0 %v100
    %v102 = vpop.xlane.xlu0 %101
    %v103 = vsel %vm69, %v64, 0.0
    %104 = vadd.xlane.f32.xlu0 %v103
    %v105 = vpop.xlane.xlu0 %104
    %v106 = vsel %vm69, %v65, 0.0
    %107 = vadd.xlane.f32.xlu0 %v106
    %v108 = vpop.xlane.xlu0 %107
    %v109 = vsel %vm69, %v66, 0.0
    %110 = vadd.xlane.f32.xlu0 %v109
    %v111 = vpop.xlane.xlu0 %110
    %v112 = vsel %vm69, %v67, 0.0
    %113 = vadd.xlane.f32.xlu0 %v112
    %v114 = vpop.xlane.xlu0 %113
    %v115 = vsel %vm69, %v68, 0.0
    %116 = vadd.xlane.f32.xlu0 %v115
    %v117 = vpop.xlane.xlu0 %116
    %s118 = sld [smem:[#allocation2]]
    %v119 = vstv %s118
    %v120 = vadd.f32 %v72, %v119
    %v121 = vadd.f32 %v75, %v119
    %v122 = vadd.f32 %v78, %v119
    %v123 = vadd.f32 %v81, %v119
    %v124 = vadd.f32 %v84, %v119
    %v125 = vadd.f32 %v87, %v119
    %v126 = vadd.f32 %v90, %v119
    %v127 = vadd.f32 %v93, %v119
    %v128 = vadd.f32 %v96, %v119
    %v129 = vadd.f32 %v99, %v119
    %v130 = vadd.f32 %v102, %v119
    %v131 = vadd.f32 %v105, %v119
    %v132 = vadd.f32 %v108, %v119
    %v133 = vadd.f32 %v111, %v119
    %v134 = vadd.f32 %v114, %v119
    %v135 = vadd.f32 %v117, %v119
    %v152 = vlaneseq
    %v153 = vand.u32 %v152, 127
    %v154 = vlaneseq
    %v155 = vshrl.u32 %v154, 7
    %v156 = vsub.s32 %v153, %v155
    %v157 = vrot.slane %v120, %v156
    %v158 = vadd.s32 %v153, 4294967288
    %v159 = vlaneseq
    %v160 = vshrl.u32 %v159, 7
    %v161 = vsub.s32 %v158, %v160
    %v162 = vrot.slane %v121, %v161
    %vm163 = vcmask 130112
    %v164 = vsel %vm163, %v162, %v157
    %v165 = vadd.s32 %v153, 4294967280
    %v166 = vlaneseq
    %v167 = vshrl.u32 %v166, 7
    %v168 = vsub.s32 %v165, %v167
    %v169 = vrot.slane %v122, %v168
    %vm170 = vcmask 195712
    %v171 = vsel %vm170, %v169, %v164
    %v172 = vadd.s32 %v153, 4294967272
    %v173 = vlaneseq
    %v174 = vshrl.u32 %v173, 7
    %v175 = vsub.s32 %v172, %v174
    %v176 = vrot.slane %v123, %v175
    %vm177 = vcmask 261312
    %v178 = vsel %vm177, %v176, %v171
    %v179 = vadd.s32 %v153, 4294967264
    %v180 = vlaneseq
    %v181 = vshrl.u32 %v180, 7
    %v182 = vsub.s32 %v179, %v181
    %v183 = vrot.slane %v124, %v182
    %vm184 = vcmask 326912
    %v185 = vsel %vm184, %v183, %v178
    %v186 = vadd.s32 %v153, 4294967256
    %v187 = vlaneseq
    %v188 = vshrl.u32 %v187, 7
    %v189 = vsub.s32 %v186, %v188
    %v190 = vrot.slane %v125, %v189
    %vm191 = vcmask 392512
    %v192 = vsel %vm191, %v190, %v185
    %v193 = vadd.s32 %v153, 4294967248
    %v194 = vlaneseq
    %v195 = vshrl.u32 %v194, 7
    %v196 = vsub.s32 %v193, %v195
    %v197 = vrot.slane %v126, %v196
    %vm198 = vcmask 458112
    %v199 = vsel %vm198, %v197, %v192
    %v200 = vadd.s32 %v153, 4294967240
    %v201 = vlaneseq
    %v202 = vshrl.u32 %v201, 7
    %v203 = vsub.s32 %v200, %v202
    %v204 = vrot.slane %v127, %v203
    %vm205 = vcmask 523712
    %v206 = vsel %vm205, %v204, %v199
    %v207 = vadd.s32 %v153, 4294967232
    %v208 = vlaneseq
    %v209 = vshrl.u32 %v208, 7
    %v210 = vsub.s32 %v207, %v209
    %v211 = vrot.slane %v128, %v210
    %vm212 = vcmask 589312
    %v213 = vsel %vm212, %v211, %v206
    %v214 = vadd.s32 %v153, 4294967224
    %v215 = vlaneseq
    %v216 = vshrl.u32 %v215, 7
    %v217 = vsub.s32 %v214, %v216
    %v218 = vrot.slane %v129, %v217
    %vm219 = vcmask 654912
    %v220 = vsel %vm219, %v218, %v213
    %v221 = vadd.s32 %v153, 4294967216
    %v222 = vlaneseq
    %v223 = vshrl.u32 %v222, 7
    %v224 = vsub.s32 %v221, %v223
    %v225 = vrot.slane %v130, %v224
    %vm226 = vcmask 720512
    %v227 = vsel %vm226, %v225, %v220
    %v228 = vadd.s32 %v153, 4294967208
    %v229 = vlaneseq
    %v230 = vshrl.u32 %v229, 7
    %v231 = vsub.s32 %v228, %v230
    %v232 = vrot.slane %v131, %v231
    %vm233 = vcmask 786112
    %v234 = vsel %vm233, %v232, %v227
    %v235 = vadd.s32 %v153, 4294967200
    %v236 = vlaneseq
    %v237 = vshrl.u32 %v236, 7
    %v238 = vsub.s32 %v235, %v237
    %v239 = vrot.slane %v132, %v238
    %vm240 = vcmask 851712
    %v241 = vsel %vm240, %v239, %v234
    %v242 = vadd.s32 %v153, 4294967192
    %v243 = vlaneseq
    %v244 = vshrl.u32 %v243, 7
    %v245 = vsub.s32 %v242, %v244
    %v246 = vrot.slane %v133, %v245
    %vm247 = vcmask 917312
    %v248 = vsel %vm247, %v246, %v241
    %v249 = vadd.s32 %v153, 4294967184
    %v250 = vlaneseq
    %v251 = vshrl.u32 %v250, 7
    %v252 = vsub.s32 %v249, %v251
    %v253 = vrot.slane %v134, %v252
    %vm254 = vcmask 982912
    %v255 = vsel %vm254, %v253, %v248
    %v256 = vadd.s32 %v153, 4294967176
    %v257 = vlaneseq
    %v258 = vshrl.u32 %v257, 7
    %v259 = vsub.s32 %v256, %v258
    %v260 = vrot.slane %v135, %v259
    %vm261 = vcmask 1048512
    %v262 = vsel %vm261, %v260, %v255
    %264 = vst [vmem:[#allocation6] sm:$0x1] %v262
    // Predicated region
    $region18: #{tpu_custom_call.1} parent=1 // pred_check
      _
    $region19: #{tpu_custom_call.1} parent=1 // pred_check_branch
      %266 = sbr.rel (0) target = $region21
    $region20: #{tpu_custom_call.1} parent=1 // pred_region
      %s268 = ssub.s32 16, 16
      %269 = vsyncadd [#allocation5], %s268
      %s271 = sshll.u32 [#allocation6], 4
      %s272 = int_to_ptr.vmem [resolvable:$true] %s271
      %274 = dma.vmem_to_hbm [thread:$0]  %s272, 16, %s3, [#allocation5]
    $region21: #{tpu_custom_call.1} parent=1 // pred_fallthru
      _
    // Predicated region
    $region22: #{tpu_custom_call.1} parent=1 // pred_check
      _
    $region23: #{tpu_custom_call.1} parent=1 // pred_check_branch
      %276 = sbr.rel (0) target = $region25
    $region24: #{tpu_custom_call.1} parent=1 // pred_region
      %277 = dma.done [#allocation5], 16
    $region25: #{tpu_custom_call.1} parent=1 // pred_fallthru
      _
    %278 = vsyncpa [#allocation4], 1
    %279 = vsyncpa [#allocation5], 1

</llo_original>
